<compile_context>
chip_gen: v6e
topology: v6e:2x2x1
jax: 0.10.0
libtpu: 0.0.40
codegen_flags: <defaults>
</compile_context>

<pallas_src>
import functools

import jax
import jax.numpy as jnp
from jax import lax
from jax.experimental import pallas as pl
from jax.experimental.pallas import tpu as pltpu


def _round_up(n: int, m: int) -> int:
    return ((n + m - 1) // m) * m


def _vmem_budget_bytes() -> int:
    """Per-generation scoped-VMEM budget (v5e/v6e: ~100 MiB, v7x: ~48 MiB)."""
    cap = 64 * 1024 * 1024
    try:
        info = pltpu.get_tpu_info()
        cap = int(getattr(info, "vmem_capacity_bytes", cap))
    except Exception:
        pass
    return max(32 * 1024 * 1024, min(int(0.75 * cap), 100 * 1024 * 1024))


def _mlp_head_kernel(x_ref, w1_ref, pvec_ref, w2_ref, b2_ref, o_ref, *scratch,
                     hidden: int, eps: float, nk: int, needs_mask: bool):
    """acc += x @ w1; at last K step: bias + SquaredReLU + LN, then @ w2 + b2."""

    def epilogue(h32):
        h32 = h32 + pvec_ref[0:1, :]                       # + b1   (TM, Hp) f32
        r = jnp.maximum(h32, 0.0)
        h32 = r * r                                        # SquaredReLU
        inv_h = 1.0 / hidden
        # Padded hidden columns of h32 are exactly zero (zero-padded w1/b1),
        # so the raw sum only needs dividing by the true hidden width.
        mean = jnp.sum(h32, axis=-1, keepdims=True) * inv_h
        if needs_mask:
            col = lax.broadcasted_iota(jnp.int32, h32.shape, 1)
            cen = jnp.where(col < hidden, h32 - mean, 0.0)
        else:
            cen = h32 - mean
        var = jnp.sum(cen * cen, axis=-1, keepdims=True) * inv_h
        inv = lax.rsqrt(var + eps)
        y = cen * inv * pvec_ref[1:2, :] + pvec_ref[2:3, :]   # gamma / beta
        # fc2 on the MXU with bf16 operands, f32 accumulation. Padded rows of
        # w2 are zero, so padded hidden columns of y cannot contribute.
        out = jnp.dot(y.astype(w2_ref.dtype), w2_ref[...],
                      preferred_element_type=jnp.float32) + b2_ref[...]
        o_ref[...] = out.astype(o_ref.dtype)

    part = jnp.dot(x_ref[...], w1_ref[...], preferred_element_type=jnp.float32)

    if nk == 1:
        # Single reduction step: no accumulator scratch, no phase predication.
        epilogue(part)
    else:
        acc_ref = scratch[0]
        k = pl.program_id(1)

        @pl.when(k == 0)
        def _():
            acc_ref[...] = part

        @pl.when(k > 0)
        def _():
            acc_ref[...] += part

        @pl.when(k == nk - 1)
        def _():
            epilogue(acc_ref[...])


def prepare_mlp_head_params(w1, b1, gamma, beta, w2, b2,
                            *, compute_dtype=jnp.bfloat16):
    """Pad / cast parameters ONCE (hoisted out of the per-call forward path)."""
    dim, hidden = w1.shape
    num_classes = w2.shape[1]
    Kp = _round_up(dim, 128)
    Hp = _round_up(hidden, 128)
    Cp = _round_up(num_classes, 128)
    f32 = jnp.float32

    w1p = jnp.zeros((Kp, Hp), compute_dtype).at[:dim, :hidden].set(
        w1.astype(compute_dtype))
    # b1 / gamma / beta packed into one array -> single DMA / VMEM slot.
    pvec = jnp.zeros((3, Hp), f32)
    pvec = pvec.at[0, :hidden].set(b1.astype(f32))
    pvec = pvec.at[1, :hidden].set(gamma.astype(f32))
    pvec = pvec.at[2, :hidden].set(beta.astype(f32))
    w2p = jnp.zeros((Hp, Cp), compute_dtype).at[:hidden, :num_classes].set(
        w2.astype(compute_dtype))
    b2p = jnp.zeros((1, Cp), f32).at[0, :num_classes].set(b2.astype(f32))

    return {"w1p": w1p, "pvec": pvec, "w2p": w2p, "b2p": b2p,
            "dim": dim, "hidden": hidden, "num_classes": num_classes}


def mlp_head_forward(x, params, *, eps: float = 1e-5):
    """MlpHead forward. x: (..., dim) -> (..., num_classes), dtype of x."""
    w1p, pvec = params["w1p"], params["pvec"]
    w2p, b2p = params["w2p"], params["b2p"]
    dim, hidden = params["dim"], params["hidden"]
    num_classes = params["num_classes"]

    Kp, Hp = w1p.shape
    Cp = w2p.shape[1]
    compute_dtype = w1p.dtype
    cb = jnp.dtype(compute_dtype).itemsize
    ob = jnp.dtype(x.dtype).itemsize

    orig_shape = x.shape
    x2 = x.reshape(-1, dim)
    M = x2.shape[0]

    budget = _vmem_budget_bytes()
    row_align = 16 if cb < 4 else 8

    # Row tile: big blocks for large M (amortize per-step overhead, fewer w1
    # re-streams) but >=2 blocks when possible so both v7x TCs get work.
    if M <= 128:
        TM = _round_up(M, row_align)
    elif M <= 1024:
        TM = _round_up(-(-M // 2), row_align)
    else:
        TM = 512

    # K tile: largest of (512, 256, 128) dividing the padded K.
    TK = 128
    for cand in (512, 256):
        if Kp % cand == 0:
            TK = cand
            break

    def fits(tm, tk):
        use = (2 * tm * tk * cb          # x (double-buffered)
               + 2 * tk * Hp * cb        # w1
               + 2 * Hp * Cp * cb        # w2 (VMEM-resident)
               + 2 * 8 * Hp * 4          # b1/gamma/beta pack
               + 2 * 8 * Cp * 4          # b2
               + tm * Hp * 4             # f32 accumulator scratch
               + 2 * tm * Cp * ob)       # output
        return use <= budget

    while not fits(TM, TK):
        if TK > 128 and Kp % (TK // 2) == 0:
            TK //= 2
        elif TM > row_align:
            TM = max(row_align, _round_up(TM // 2, row_align))
        else:
            # TODO(synk): extremely large hidden*num_classes would need a
            # class-tiled fallback; not required for classifier-head sizes.
            break

    Mp = _round_up(M, TM)
    nk = Kp // TK
    needs_mask = hidden != Hp

    # Only the activation is padded per call (weights pre-padded at init).
    xp = jnp.zeros((Mp, Kp), compute_dtype).at[:M, :dim].set(
        x2.astype(compute_dtype))

    kernel = functools.partial(_mlp_head_kernel, hidden=hidden, eps=eps,
                               nk=nk, needs_mask=needs_mask)
    scratch = [pltpu.VMEM((TM, Hp), jnp.float32)] if nk > 1 else []

    out = pl.pallas_call(
        kernel,
        out_shape=jax.ShapeDtypeStruct((Mp, Cp), x.dtype),
        grid_spec=pltpu.PrefetchScalarGridSpec(
            num_scalar_prefetch=0,
            grid=(Mp // TM, nk),
            in_specs=[
                pl.BlockSpec((TM, TK), lambda i, k: (i, k)),   # x tile
                pl.BlockSpec((TK, Hp), lambda i, k: (k, 0)),   # w1 tile
                pl.BlockSpec((3, Hp), lambda i, k: (0, 0)),    # b1/gamma/beta
                pl.BlockSpec((Hp, Cp), lambda i, k: (0, 0)),   # w2 (resident)
                pl.BlockSpec((1, Cp), lambda i, k: (0, 0)),    # b2
            ],
            out_specs=pl.BlockSpec((TM, Cp), lambda i, k: (i, 0)),
            scratch_shapes=scratch,
        ),
        compiler_params=pltpu.CompilerParams(
            dimension_semantics=("parallel", "arbitrary"),
            vmem_limit_bytes=budget),
    )(xp, w1p, pvec, w2p, b2p)

    out = out[:M, :num_classes]
    return out.reshape(orig_shape[:-1] + (num_classes,))


if __name__ == "__main__":
    key = jax.random.PRNGKey(0)
    batch, dim, mlp_ratio, num_classes = 8, 32, 2, 10
    hidden = mlp_ratio * dim

    k1, k2, k3, k4, k5, k6, k7 = jax.random.split(key, 7)
    x = jax.random.normal(k1, (batch, dim), dtype=jnp.float32)
    w1 = 0.1 * jax.random.normal(k2, (dim, hidden), dtype=jnp.float32)
    b1 = 0.1 * jax.random.normal(k3, (hidden,), dtype=jnp.float32)
    gamma = 1.0 + 0.1 * jax.random.normal(k4, (hidden,), dtype=jnp.float32)
    beta = 0.1 * jax.random.normal(k5, (hidden,), dtype=jnp.float32)
    w2 = 0.1 * jax.random.normal(k6, (hidden, num_classes), dtype=jnp.float32)
    b2 = 0.1 * jax.random.normal(k7, (num_classes,), dtype=jnp.float32)

    params = prepare_mlp_head_params(w1, b1, gamma, beta, w2, b2)
    y = mlp_head_forward(x, params)
    jax.block_until_ready(y)

    # Pure-f32 reference (PyTorch MlpHead forward semantics).
    def ref(xf, w1f, b1f, gf, bef, w2f, b2f):
        h = xf @ w1f + b1f
        h = jnp.square(jnp.maximum(h, 0.0))
        mu = h.mean(-1, keepdims=True)
        var = jnp.mean((h - mu) ** 2, axis=-1, keepdims=True)
        h = (h - mu) / jnp.sqrt(var + 1e-5) * gf + bef
        return h @ w2f + b2f

    y_f32 = ref(x, w1, b1, gamma, beta, w2, b2)

    # bf16-rounded reference mirroring the kernel's compute dtype (tight check).
    bf = lambda a: a.astype(jnp.bfloat16).astype(jnp.float32)
    h_bf = bf(x) @ bf(w1) + b1
    h_bf = jnp.square(jnp.maximum(h_bf, 0.0))
    mu = h_bf.mean(-1, keepdims=True)
    var = jnp.mean((h_bf - mu) ** 2, axis=-1, keepdims=True)
    h_bf = (h_bf - mu) / jnp.sqrt(var + 1e-5) * gamma + beta
    y_bf = bf(h_bf) @ bf(w2) + b2

    assert y.shape == (batch, num_classes) and y.dtype == x.dtype
    assert jnp.allclose(y, y_bf, atol=5e-3, rtol=5e-3), float(
        jnp.max(jnp.abs(y - y_bf)))
    # Looser tolerance vs the pure-f32 reference (bf16 MXU operands).
    assert jnp.allclose(y, y_f32, atol=5e-2, rtol=5e-2), float(
        jnp.max(jnp.abs(y - y_f32)))
    print("KERNEL_OK")
</pallas_src>

<mosaic_0001>
module attributes {stable_mosaic.version = 11 : i64} {
  func.func @_mlp_head_kernel(%arg0: i32, %arg1: i32, %arg2: memref<16x128xbf16, #tpu.memory_space<vmem>>, %arg3: memref<128x128xbf16, #tpu.memory_space<vmem>>, %arg4: memref<3x128xf32, #tpu.memory_space<vmem>>, %arg5: memref<128x128xbf16, #tpu.memory_space<vmem>>, %arg6: memref<1x128xf32, #tpu.memory_space<vmem>>, %arg7: memref<16x128xf32, #tpu.memory_space<vmem>>) attributes {dimension_semantics = [#tpu.dimension_semantics<parallel>, #tpu.dimension_semantics<arbitrary>], iteration_bounds = array<i64: 1, 1>, scalar_prefetch = 0 : i64, scratch_operands = 0 : i64, tpu.core_type = #tpu.core_type<tc>, window_params = [{transform_indices = @transform_0, window_bounds = array<i64: 16, 128>}, {transform_indices = @transform_1, window_bounds = array<i64: 128, 128>}, {pipeline_mode = #tpu.pipeline_mode<synchronous>, transform_indices = @transform_2, window_bounds = array<i64: 3, 128>}, {pipeline_mode = #tpu.pipeline_mode<synchronous>, transform_indices = @transform_3, window_bounds = array<i64: 128, 128>}, {pipeline_mode = #tpu.pipeline_mode<synchronous>, transform_indices = @transform_4, window_bounds = array<i64: 1, 128>}, {transform_indices = @transform_5, window_bounds = array<i64: 16, 128>}]} {
    %c0 = arith.constant 0 : index
    %c0_0 = arith.constant 0 : index
    %0 = vector.load %arg2[%c0, %c0_0] : memref<16x128xbf16, #tpu.memory_space<vmem>>, vector<16x128xbf16>
    %c0_1 = arith.constant 0 : index
    %c0_2 = arith.constant 0 : index
    %1 = vector.load %arg3[%c0_1, %c0_2] : memref<128x128xbf16, #tpu.memory_space<vmem>>, vector<128x128xbf16>
    %cst = arith.constant dense<0.000000e+00> : vector<16x128xf32>
    %2 = tpu.matmul %0, %1, %cst {dimension_numbers = #tpu.dot_dimension_numbers<[1], [0], [0], [1], [0, 0, 1, 1], [], []>} : vector<16x128xbf16>, vector<128x128xbf16>, vector<16x128xf32> -> vector<16x128xf32>
    %c0_3 = arith.constant 0 : index
    %c0_4 = arith.constant 0 : index
    %3 = vector.load %arg4[%c0_3, %c0_4] : memref<3x128xf32, #tpu.memory_space<vmem>>, vector<1x128xf32>
    %4 = vector.broadcast %3 : vector<1x128xf32> to vector<16x128xf32>
    %5 = arith.addf %2, %4 : vector<16x128xf32>
    %cst_5 = arith.constant 0.000000e+00 : f32
    %6 = vector.broadcast %cst_5 : f32 to vector<16x128xf32>
    %7 = arith.maximumf %5, %6 : vector<16x128xf32>
    %8 = arith.mulf %7, %7 : vector<16x128xf32>
    %cst_6 = arith.constant dense<0.000000e+00> : vector<16xf32>
    %9 = vector.multi_reduction <add>, %8, %cst_6 [1] : vector<16x128xf32> to vector<16xf32>
    %10 = vector.shape_cast %9 : vector<16xf32> to vector<16x1xf32>
    %cst_7 = arith.constant 1.562500e-02 : f32
    %11 = vector.broadcast %cst_7 : f32 to vector<16x1xf32>
    %12 = arith.mulf %10, %11 : vector<16x1xf32>
    %13 = tpu.iota {dimensions = array<i32: 1>} : vector<16x128xi32>
    %c64_i32 = arith.constant 64 : i32
    %14 = vector.broadcast %c64_i32 : i32 to vector<16x128xi32>
    %15 = arith.cmpi slt, %13, %14 : vector<16x128xi32>
    %16 = vector.broadcast %12 : vector<16x1xf32> to vector<16x128xf32>
    %17 = arith.subf %8, %16 : vector<16x128xf32>
    %cst_8 = arith.constant 0.000000e+00 : f32
    %18 = vector.broadcast %cst_8 : f32 to vector<16x128xf32>
    %19 = arith.select %15, %17, %18 : vector<16x128xi1>, vector<16x128xf32>
    %20 = arith.mulf %19, %19 : vector<16x128xf32>
    %cst_9 = arith.constant dense<0.000000e+00> : vector<16xf32>
    %21 = vector.multi_reduction <add>, %20, %cst_9 [1] : vector<16x128xf32> to vector<16xf32>
    %22 = vector.shape_cast %21 : vector<16xf32> to vector<16x1xf32>
    %cst_10 = arith.constant 1.562500e-02 : f32
    %23 = vector.broadcast %cst_10 : f32 to vector<16x1xf32>
    %24 = arith.mulf %22, %23 : vector<16x1xf32>
    %cst_11 = arith.constant 9.99999974E-6 : f32
    %25 = vector.broadcast %cst_11 : f32 to vector<16x1xf32>
    %26 = arith.addf %24, %25 : vector<16x1xf32>
    %27 = math.rsqrt %26 : vector<16x1xf32>
    %28 = vector.broadcast %27 : vector<16x1xf32> to vector<16x128xf32>
    %29 = arith.mulf %19, %28 : vector<16x128xf32>
    %c1 = arith.constant 1 : index
    %c0_12 = arith.constant 0 : index
    %30 = vector.load %arg4[%c1, %c0_12] : memref<3x128xf32, #tpu.memory_space<vmem>>, vector<1x128xf32>
    %31 = vector.broadcast %30 : vector<1x128xf32> to vector<16x128xf32>
    %32 = arith.mulf %29, %31 : vector<16x128xf32>
    %c2 = arith.constant 2 : index
    %c0_13 = arith.constant 0 : index
    %33 = vector.load %arg4[%c2, %c0_13] : memref<3x128xf32, #tpu.memory_space<vmem>>, vector<1x128xf32>
    %34 = vector.broadcast %33 : vector<1x128xf32> to vector<16x128xf32>
    %35 = arith.addf %32, %34 : vector<16x128xf32>
    %36 = arith.truncf %35 : vector<16x128xf32> to vector<16x128xbf16>
    %c0_14 = arith.constant 0 : index
    %c0_15 = arith.constant 0 : index
    %37 = vector.load %arg5[%c0_14, %c0_15] : memref<128x128xbf16, #tpu.memory_space<vmem>>, vector<128x128xbf16>
    %cst_16 = arith.constant dense<0.000000e+00> : vector<16x128xf32>
    %38 = tpu.matmul %36, %37, %cst_16 {dimension_numbers = #tpu.dot_dimension_numbers<[1], [0], [0], [1], [0, 0, 1, 1], [], []>} : vector<16x128xbf16>, vector<128x128xbf16>, vector<16x128xf32> -> vector<16x128xf32>
    %c0_17 = arith.constant 0 : index
    %c0_18 = arith.constant 0 : index
    %39 = vector.load %arg6[%c0_17, %c0_18] : memref<1x128xf32, #tpu.memory_space<vmem>>, vector<1x128xf32>
    %40 = vector.broadcast %39 : vector<1x128xf32> to vector<16x128xf32>
    %41 = arith.addf %38, %40 : vector<16x128xf32>
    %c0_19 = arith.constant 0 : index
    %c0_20 = arith.constant 0 : index
    %42 = vector.load %arg7[%c0_19, %c0_20] : memref<16x128xf32, #tpu.memory_space<vmem>>, vector<16x128xf32>
    tpu.vector_store %arg7[%c0_19, %c0_20], %41 {strides = array<i32>} : memref<16x128xf32, #tpu.memory_space<vmem>>, vector<16x128xf32>,
    return
  }
  func.func @transform_0(%arg0: i32, %arg1: i32) -> (i32, i32) {
    %c0_i32 = arith.constant 0 : i32
    return %arg0, %arg1 : i32, i32
  }
  func.func @transform_1(%arg0: i32, %arg1: i32) -> (i32, i32) {
    %c0_i32 = arith.constant 0 : i32
    %c0_i32_0 = arith.constant 0 : i32
    return %arg1, %c0_i32 : i32, i32
  }
  func.func @transform_2(%arg0: i32, %arg1: i32) -> (i32, i32) {
    %c0_i32 = arith.constant 0 : i32
    %c0_i32_0 = arith.constant 0 : i32
    %c0_i32_1 = arith.constant 0 : i32
    return %c0_i32, %c0_i32_0 : i32, i32
  }
  func.func @transform_3(%arg0: i32, %arg1: i32) -> (i32, i32) {
    %c0_i32 = arith.constant 0 : i32
    %c0_i32_0 = arith.constant 0 : i32
    %c0_i32_1 = arith.constant 0 : i32
    return %c0_i32, %c0_i32_0 : i32, i32
  }
  func.func @transform_4(%arg0: i32, %arg1: i32) -> (i32, i32) {
    %c0_i32 = arith.constant 0 : i32
    %c0_i32_0 = arith.constant 0 : i32
    %c0_i32_1 = arith.constant 0 : i32
    return %c0_i32, %c0_i32_0 : i32, i32
  }
  func.func @transform_5(%arg0: i32, %arg1: i32) -> (i32, i32) {
    %c0_i32 = arith.constant 0 : i32
    %c0_i32_0 = arith.constant 0 : i32
    return %arg0, %c0_i32 : i32, i32
  }
}

</mosaic_0001>

<llo_original>
// kernel: tpu_custom_call.1
$region0: #{tpu_custom_call.1}
  #allocation0 [shape = 'u32[]', space=smem, size = 0x4, offset = 0x4, fixed_abs, tag = 'smem constant byte address 0x4 - core index']
  #allocation1 [shape = 'u32[144,128]{1,0:T(1,128)}', space=vmem, size = 0x12000, scoped, tag = 'internal scratch']
  %s0 = inlined_call_operand.hbm [shape: bf16[16,128], index: 0, kind: input, shape index: {}]
  %s1 = inlined_call_operand.hbm [shape: bf16[128,128], index: 1, kind: input, shape index: {}]
  %s2 = inlined_call_operand.hbm [shape: f32[3,128], index: 2, kind: input, shape index: {}]
  %s3 = inlined_call_operand.hbm [shape: bf16[128,128], index: 3, kind: input, shape index: {}]
  %s4 = inlined_call_operand.vmem [shape: f32[1,128], index: 4, kind: input, shape index: {}]
  %s5 = inlined_call_operand.hbm [shape: f32[16,128], index: 5, kind: output, shape index: {}]
  %s6 = sld [smem:[#allocation0]]
  $region46: #{tpu_custom_call.1} parent=0
    _
  %s8 = ssub.s32 1, %s6
  %s9 = scalar_select 0, %s8, %s6
  $region1: #{tpu_custom_call.1} parent=0
    #allocation2 [shape = 'u8[4096]{0}', space=vmem, size = 0x1000, scoped, tag = 'input window, operand 0, single buffered']
    #allocation3 [shape = 's32[1]{0}', space=sflag, size = 0x4, scoped, tag = 'scoped memory for tpu_custom_call.1']
    #allocation4 [shape = 's32[1]{0}', space=sflag, size = 0x4, scoped, tag = 'scoped memory for tpu_custom_call.1']
    #allocation5 [shape = 'u8[32768]{0}', space=vmem, size = 0x8000, scoped, tag = 'input window, operand 1, single buffered']
    #allocation6 [shape = 's32[1]{0}', space=sflag, size = 0x4, scoped, tag = 'scoped memory for tpu_custom_call.1']
    #allocation7 [shape = 'u8[2048]{0}', space=vmem, size = 0x800, scoped, tag = 'input window, operand 2, single buffered']
    #allocation8 [shape = 'u8[32768]{0}', space=vmem, size = 0x8000, scoped, tag = 'input window, operand 3, single buffered']
    #allocation9 [shape = 's32[1]{0}', space=sflag, size = 0x4, scoped, tag = 'scoped memory for tpu_custom_call.1']
    #allocation10 [shape = 'u8[8192]{0}', space=vmem, size = 0x2000, scoped, tag = 'output window, operand 0, single buffered']
    %10 = vsyncpa [#allocation3], 0
    %11 = vsyncpa [#allocation6], 0
    %12 = vsyncpa [#allocation9], 0
    %13 = vsyncpa [#allocation4], 0
    // Predicated region
    $region2: #{tpu_custom_call.1} parent=1 // pred_check
      _
    $region3: #{tpu_custom_call.1} parent=1 // pred_check_branch
      %15 = sbr.rel (0) target = $region5
    $region4: #{tpu_custom_call.1} parent=1 // pred_region
      %s17 = ssub.s32 128, 128
      %18 = vsyncadd [#allocation3], %s17
      %s19 = sshll.u32 [#allocation2], 4
      %s20 = int_to_ptr.vmem [resolvable:$true] %s19
      %25 = dma.hbm_to_vmem [thread:$0]  %s0, 128, %s20, [#allocation3], 64, 64, 4
    $region5: #{tpu_custom_call.1} parent=1 // pred_fallthru
      _
    // Predicated region
    $region6: #{tpu_custom_call.1} parent=1 // pred_check
      _
    $region7: #{tpu_custom_call.1} parent=1 // pred_check_branch
      %27 = sbr.rel (0) target = $region9
    $region8: #{tpu_custom_call.1} parent=1 // pred_region
      %s29 = ssub.s32 1024, 1024
      %30 = vsyncadd [#allocation6], %s29
      %s31 = sshll.u32 [#allocation5], 4
      %s32 = int_to_ptr.vmem [resolvable:$true] %s31
      %37 = dma.hbm_to_vmem [thread:$0]  %s1, 1024, %s32, [#allocation6], 64, 64, 4
    $region9: #{tpu_custom_call.1} parent=1 // pred_fallthru
      _
    // Predicated region
    $region10: #{tpu_custom_call.1} parent=1 // pred_check
      _
    $region11: #{tpu_custom_call.1} parent=1 // pred_check_branch
      %39 = sbr.rel (0) target = $region13
    $region12: #{tpu_custom_call.1} parent=1 // pred_region
      %s41 = ssub.s32 64, 64
      %42 = vsyncadd [#allocation6], %s41
      %s44 = sshll.u32 [#allocation7], 4
      %s45 = int_to_ptr.vmem [resolvable:$true] %s44
      %47 = dma.hbm_to_vmem [thread:$0]  %s2, 64, %s45, [#allocation6]
    $region13: #{tpu_custom_call.1} parent=1 // pred_fallthru
      _
    // Predicated region
    $region14: #{tpu_custom_call.1} parent=1 // pred_check
      _
    $region15: #{tpu_custom_call.1} parent=1 // pred_check_branch
      %49 = sbr.rel (0) target = $region17
    $region16: #{tpu_custom_call.1} parent=1 // pred_region
      %s51 = ssub.s32 1024, 1024
      %52 = vsyncadd [#allocation9], %s51
      %s53 = sshll.u32 [#allocation8], 4
      %s54 = int_to_ptr.vmem [resolvable:$true] %s53
      %59 = dma.hbm_to_vmem [thread:$0]  %s3, 1024, %s54, [#allocation9], 64, 64, 4
    $region17: #{tpu_custom_call.1} parent=1 // pred_fallthru
      _
    // Predicated region
    $region18: #{tpu_custom_call.1} parent=1 // pred_check
      _
    $region19: #{tpu_custom_call.1} parent=1 // pred_check_branch
      %61 = sbr.rel (0) target = $region21
    $region20: #{tpu_custom_call.1} parent=1 // pred_region
      _
    $region21: #{tpu_custom_call.1} parent=1 // pred_fallthru
      _
    // Predicated region
    $region22: #{tpu_custom_call.1} parent=1 // pred_check
      _
    $region23: #{tpu_custom_call.1} parent=1 // pred_check_branch
      %63 = sbr.rel (0) target = $region25
    $region24: #{tpu_custom_call.1} parent=1 // pred_region
      %64 = dma.done [#allocation3], 128
    $region25: #{tpu_custom_call.1} parent=1 // pred_fallthru
      _
    // Predicated region
    $region26: #{tpu_custom_call.1} parent=1 // pred_check
      _
    $region27: #{tpu_custom_call.1} parent=1 // pred_check_branch
      %66 = sbr.rel (0) target = $region29
    $region28: #{tpu_custom_call.1} parent=1 // pred_region
      %67 = dma.done [#allocation6], 1024
    $region29: #{tpu_custom_call.1} parent=1 // pred_fallthru
      _
    // Predicated region
    $region30: #{tpu_custom_call.1} parent=1 // pred_check
      _
    $region31: #{tpu_custom_call.1} parent=1 // pred_check_branch
      %69 = sbr.rel (0) target = $region33
    $region32: #{tpu_custom_call.1} parent=1 // pred_region
      %70 = dma.done [#allocation6], 64
    $region33: #{tpu_custom_call.1} parent=1 // pred_fallthru
      _
    // Predicated region
    $region34: #{tpu_custom_call.1} parent=1 // pred_check
      _
    $region35: #{tpu_custom_call.1} parent=1 // pred_check_branch
      %72 = sbr.rel (0) target = $region37
    $region36: #{tpu_custom_call.1} parent=1 // pred_region
      %73 = dma.done [#allocation9], 1024
    $region37: #{tpu_custom_call.1} parent=1 // pred_fallthru
      _
    %v75 = vld [vmem:[#allocation2] sm:$0xf]
    %v76 = vld [vmem:[#allocation2 + $0x4] sm:$0xf]
    %v77 = vld [vmem:[#allocation5] sm:$0xf]
    %v78 = vld [vmem:[#allocation5 + $0x4] sm:$0xf]
    %v79 = vld [vmem:[#allocation5 + $0x8] sm:$0xf]
    %v80 = vld [vmem:[#allocation5 + $0xc] sm:$0xf]
    %v81 = vld [vmem:[#allocation5 + $0x10] sm:$0xf]
    %v82 = vld [vmem:[#allocation5 + $0x14] sm:$0xf]
    %v83 = vld [vmem:[#allocation5 + $0x18] sm:$0xf]
    %v84 = vld [vmem:[#allocation5 + $0x1c] sm:$0xf]
    %v85 = vld [vmem:[#allocation5 + $0x20] sm:$0xf]
    %v86 = vld [vmem:[#allocation5 + $0x24] sm:$0xf]
    %v87 = vld [vmem:[#allocation5 + $0x28] sm:$0xf]
    %v88 = vld [vmem:[#allocation5 + $0x2c] sm:$0xf]
    %v89 = vld [vmem:[#allocation5 + $0x30] sm:$0xf]
    %v90 = vld [vmem:[#allocation5 + $0x34] sm:$0xf]
    %v91 = vld [vmem:[#allocation5 + $0x38] sm:$0xf]
    %v92 = vld [vmem:[#allocation5 + $0x3c] sm:$0xf]
    %v93 = vld [vmem:[#allocation7] sm:$0x1]
    %v94 = vlaneseq
    %v95 = vshrl.u32 %v94, 7
    %v96 = vsub.s32 0, %v95
    %v97 = vrot.slane %v93, %v96
    %v100 = vunpack.c.l.b16 %v75
    %v101 = vunpack.c.l.b16 %v76
    %v102 = vpack.c.b16 %v101, %v100
    %v120 = vunpack.c.l.b16 %v77
    %v121 = vunpack.c.l.b16 %v78
    %v122 = vunpack.c.l.b16 %v79
    %v123 = vunpack.c.l.b16 %v80
    %v124 = vunpack.c.l.b16 %v81
    %v125 = vunpack.c.l.b16 %v82
    %v126 = vunpack.c.l.b16 %v83
    %v127 = vunpack.c.l.b16 %v84
    %v128 = vunpack.c.l.b16 %v85
    %v129 = vunpack.c.l.b16 %v86
    %v130 = vunpack.c.l.b16 %v87
    %v131 = vunpack.c.l.b16 %v88
    %v132 = vunpack.c.l.b16 %v89
    %v133 = vunpack.c.l.b16 %v90
    %v134 = vunpack.c.l.b16 %v91
    %v135 = vunpack.c.l.b16 %v92
    %v136 = vpack.c.b16 %v121, %v120
    %v137 = vpack.c.b16 %v123, %v122
    %v138 = vpack.c.b16 %v125, %v124
    %v139 = vpack.c.b16 %v127, %v126
    %v140 = vpack.c.b16 %v129, %v128
    %v141 = vpack.c.b16 %v131, %v130
    %v142 = vpack.c.b16 %v133, %v132
    %v143 = vpack.c.b16 %v135, %v134
    %152 = vmatprep.subr.bf16.mxu0 0
    %153 = vmatpush1.bf16.msra.mxu0 %v143
    %154 = vmatprep.subr.bf16.mxu0 0
    %155 = vmatpush1.bf16.msra.mxu0 %v142
    %156 = vmatprep.subr.bf16.mxu0 0
    %157 = vmatpush1.bf16.msra.mxu0 %v141
    %158 = vmatprep.subr.bf16.mxu0 0
    %159 = vmatpush1.bf16.msra.mxu0 %v140
    %160 = vmatprep.subr.bf16.mxu0 0
    %161 = vmatpush1.bf16.msra.mxu0 %v139
    %162 = vmatprep.subr.bf16.mxu0 0
    %163 = vmatpush1.bf16.msra.mxu0 %v138
    %164 = vmatprep.subr.bf16.mxu0 0
    %165 = vmatpush1.bf16.msra.mxu0 %v137
    %166 = vmatprep.subr.bf16.mxu0 0
    %167 = vmatpush1.bf16.msra.mxu0 %v136
    %168 = vmatprep.subr.bf16.mxu0 0
    %169 = vmatpush2.bf16.msra.mxu0 0
    %170 = vmatprep.subr.bf16.mxu0 0
    %171 = vmatpush2.bf16.msra.mxu0 0
    %172 = vmatprep.subr.bf16.mxu0 0
    %173 = vmatpush2.bf16.msra.mxu0 0
    %174 = vmatprep.subr.bf16.mxu0 0
    %175 = vmatpush2.bf16.msra.mxu0 0
    %176 = vmatprep.subr.bf16.mxu0 0
    %177 = vmatpush2.bf16.msra.mxu0 0
    %178 = vmatprep.subr.bf16.mxu0 0
    %179 = vmatpush2.bf16.msra.mxu0 0
    %180 = vmatprep.subr.bf16.mxu0 0
    %181 = vmatpush2.bf16.msra.mxu0 0
    %182 = vmatprep.subr.bf16.mxu0 0
    %183 = vmatpush2.bf16.msra.mxu0 0
    %184 = vmatprep.mubr.bf16.mxu0 0
    %185 = vmatmul.mubr.bf16.gmra.mxu0 %v102
    %v186 = vpop.f32.mrf.mxu0
    %v187 = vadd.f32 %v97, %v186
    %v188 = vpop.f32.mrf.mxu0
    %v189 = vpop.f32.mrf.mxu0
    %v190 = vadd.f32 %v97, %v189
    %v191 = vpop.f32.mrf.mxu0
    %192 = vdwg.mxu0
    %v193 = vmax.f32 %v187, 0.0
    %v194 = vmax.f32 %v190, 0.0
    %v195 = vmul.f32 %v193, %v193
    %v196 = vmul.f32 %v194, %v194
    %197 = vadd.xlane.f32.xlu0 %v195
    %v198 = vpop.xlane.xlu0 %197
    %199 = vadd.xlane.f32.xlu0 %v196
    %v200 = vpop.xlane.xlu0 %199
    %v201 = vmul.f32 %v198, 0.015625
    %v202 = vmul.f32 %v200, 0.015625
    %v203 = vlaneseq
    %v204 = vand.u32 %v203, 127
    %vm205 = vcmp.lt.s32.totalorder %v204, 64
    %v206 = vsub.f32 %v195, %v201
    %v207 = vsub.f32 %v196, %v202
    %v208 = vsel %vm205, %v206, 0.0
    %v209 = vsel %vm205, %v207, 0.0
    %v210 = vmul.f32 %v208, %v208
    %v211 = vmul.f32 %v209, %v209
    %212 = vadd.xlane.f32.xlu0 %v210
    %v213 = vpop.xlane.xlu0 %212
    %214 = vadd.xlane.f32.xlu0 %v211
    %v215 = vpop.xlane.xlu0 %214
    %v216 = vmul.f32 %v213, 0.015625
    %v217 = vmul.f32 %v215, 0.015625
    %v218 = vadd.f32 %v216, 1e-05
    %v219 = vadd.f32 %v217, 1e-05
    %v220 = vrsqrt.pop %v218
    %v221 = vrsqrt.pop %v219
    %v222 = vmul.f32 %v208, %v220
    %v223 = vmul.f32 %v209, %v221
    %v224 = vld [vmem:[#allocation7 + $0x1] sm:$0x1]
    %v225 = vlaneseq
    %v226 = vshrl.u32 %v225, 7
    %v227 = vsub.s32 0, %v226
    %v228 = vrot.slane %v224, %v227
    %v229 = vmul.f32 %v222, %v228
    %v230 = vmul.f32 %v223, %v228
    %v231 = vld [vmem:[#allocation7 + $0x2] sm:$0x1]
    %v232 = vlaneseq
    %v233 = vshrl.u32 %v232, 7
    %v234 = vsub.s32 0, %v233
    %v235 = vrot.slane %v231, %v234
    %v236 = vadd.f32 %v229, %v235
    %v237 = vadd.f32 %v230, %v235
    %v238 = vpack.c.bf16 %v237, %v236
    %v239 = vld [vmem:[#allocation8] sm:$0xf]
    %v240 = vld [vmem:[#allocation8 + $0x4] sm:$0xf]
    %v241 = vld [vmem:[#allocation8 + $0x8] sm:$0xf]
    %v242 = vld [vmem:[#allocation8 + $0xc] sm:$0xf]
    %v243 = vld [vmem:[#allocation8 + $0x10] sm:$0xf]
    %v244 = vld [vmem:[#allocation8 + $0x14] sm:$0xf]
    %v245 = vld [vmem:[#allocation8 + $0x18] sm:$0xf]
    %v246 = vld [vmem:[#allocation8 + $0x1c] sm:$0xf]
    %v247 = vld [vmem:[#allocation8 + $0x20] sm:$0xf]
    %v248 = vld [vmem:[#allocation8 + $0x24] sm:$0xf]
    %v249 = vld [vmem:[#allocation8 + $0x28] sm:$0xf]
    %v250 = vld [vmem:[#allocation8 + $0x2c] sm:$0xf]
    %v251 = vld [vmem:[#allocation8 + $0x30] sm:$0xf]
    %v252 = vld [vmem:[#allocation8 + $0x34] sm:$0xf]
    %v253 = vld [vmem:[#allocation8 + $0x38] sm:$0xf]
    %v254 = vld [vmem:[#allocation8 + $0x3c] sm:$0xf]
    %v255 = vld [vmem:[%s4] sm:$0x1]
    %v257 = vlaneseq
    %v258 = vshrl.u32 %v257, 7
    %v259 = vsub.s32 0, %v258
    %v260 = vrot.slane %v255, %v259
    %v278 = vunpack.c.l.b16 %v239
    %v279 = vunpack.c.l.b16 %v240
    %v280 = vunpack.c.l.b16 %v241
    %v281 = vunpack.c.l.b16 %v242
    %v282 = vunpack.c.l.b16 %v243
    %v283 = vunpack.c.l.b16 %v244
    %v284 = vunpack.c.l.b16 %v245
    %v285 = vunpack.c.l.b16 %v246
    %v286 = vunpack.c.l.b16 %v247
    %v287 = vunpack.c.l.b16 %v248
    %v288 = vunpack.c.l.b16 %v249
    %v289 = vunpack.c.l.b16 %v250
    %v290 = vunpack.c.l.b16 %v251
    %v291 = vunpack.c.l.b16 %v252
    %v292 = vunpack.c.l.b16 %v253
    %v293 = vunpack.c.l.b16 %v254
    %v294 = vpack.c.b16 %v279, %v278
    %v295 = vpack.c.b16 %v281, %v280
    %v296 = vpack.c.b16 %v283, %v282
    %v297 = vpack.c.b16 %v285, %v284
    %v298 = vpack.c.b16 %v287, %v286
    %v299 = vpack.c.b16 %v289, %v288
    %v300 = vpack.c.b16 %v291, %v290
    %v301 = vpack.c.b16 %v293, %v292
    %310 = vmatprep.subr.bf16.mxu0 0
    %311 = vmatpush1.bf16.msra.mxu0 %v301
    %312 = vmatprep.subr.bf16.mxu0 0
    %313 = vmatpush1.bf16.msra.mxu0 %v300
    %314 = vmatprep.subr.bf16.mxu0 0
    %315 = vmatpush1.bf16.msra.mxu0 %v299
    %316 = vmatprep.subr.bf16.mxu0 0
    %317 = vmatpush1.bf16.msra.mxu0 %v298
    %318 = vmatprep.subr.bf16.mxu0 0
    %319 = vmatpush1.bf16.msra.mxu0 %v297
    %320 = vmatprep.subr.bf16.mxu0 0
    %321 = vmatpush1.bf16.msra.mxu0 %v296
    %322 = vmatprep.subr.bf16.mxu0 0
    %323 = vmatpush1.bf16.msra.mxu0 %v295
    %324 = vmatprep.subr.bf16.mxu0 0
    %325 = vmatpush1.bf16.msra.mxu0 %v294
    %326 = vmatprep.subr.bf16.mxu0 0
    %327 = vmatpush2.bf16.msra.mxu0 0
    %328 = vmatprep.subr.bf16.mxu0 0
    %329 = vmatpush2.bf16.msra.mxu0 0
    %330 = vmatprep.subr.bf16.mxu0 0
    %331 = vmatpush2.bf16.msra.mxu0 0
    %332 = vmatprep.subr.bf16.mxu0 0
    %333 = vmatpush2.bf16.msra.mxu0 0
    %334 = vmatprep.subr.bf16.mxu0 0
    %335 = vmatpush2.bf16.msra.mxu0 0
    %336 = vmatprep.subr.bf16.mxu0 0
    %337 = vmatpush2.bf16.msra.mxu0 0
    %338 = vmatprep.subr.bf16.mxu0 0
    %339 = vmatpush2.bf16.msra.mxu0 0
    %340 = vmatprep.subr.bf16.mxu0 0
    %341 = vmatpush2.bf16.msra.mxu0 0
    %342 = vmatprep.mubr.bf16.mxu0 0
    %343 = vmatmul.mubr.bf16.gmra.mxu0 %v238
    %v344 = vpop.f32.mrf.mxu0
    %v345 = vadd.f32 %v260, %v344
    %v346 = vpop.f32.mrf.mxu0
    %v347 = vpop.f32.mrf.mxu0
    %v348 = vadd.f32 %v260, %v347
    %v349 = vpop.f32.mrf.mxu0
    %350 = vdwg.mxu0
    %351 = vst [vmem:[#allocation10] sm:$0xff] %v345
    %352 = vst [vmem:[#allocation10 + $0x8] sm:$0xff] %v348
    // Predicated region
    $region38: #{tpu_custom_call.1} parent=1 // pred_check
      _
    $region39: #{tpu_custom_call.1} parent=1 // pred_check_branch
      %354 = sbr.rel (0) target = $region41
    $region40: #{tpu_custom_call.1} parent=1 // pred_region
      %s356 = ssub.s32 256, 256
      %357 = vsyncadd [#allocation4], %s356
      %s358 = sshll.u32 [#allocation10], 4
      %s359 = int_to_ptr.vmem [resolvable:$true] %s358
      %364 = dma.vmem_to_hbm [thread:$0]  %s359, 256, %s5, [#allocation4], 128, 128, 8
    $region41: #{tpu_custom_call.1} parent=1 // pred_fallthru
      _
    // Predicated region
    $region42: #{tpu_custom_call.1} parent=1 // pred_check
      _
    $region43: #{tpu_custom_call.1} parent=1 // pred_check_branch
      %366 = sbr.rel (0) target = $region45
    $region44: #{tpu_custom_call.1} parent=1 // pred_region
      %367 = dma.done [#allocation4], 256
    $region45: #{tpu_custom_call.1} parent=1 // pred_fallthru
      _
    %368 = vsyncpa [#allocation3], 1
    %369 = vsyncpa [#allocation6], 1
    %370 = vsyncpa [#allocation9], 1
    %371 = vsyncpa [#allocation4], 1

</llo_original>
